<compile_context>
chip_gen: v5e
topology: v5e:2x2
jax: 0.10.0
libtpu: 0.0.40
codegen_flags: <defaults>
</compile_context>

<pallas_src>
import numpy as np
import jax
import jax.numpy as jnp
from jax.experimental import pallas as pl
from jax.experimental.pallas import tpu as pltpu

EPS = 0.001
CUT_SIZE = 112

# Per-output-block VMEM budget and the scoped-VMEM limit we request.  12 MiB
# blocks double-buffer to ~24 MiB; 40 MiB limit leaves headroom and is safe on
# v5e (16 MiB scoped default would otherwise reject it), v6e, and v7x.
_VMEM_BLOCK_BUDGET_BYTES = 12 * 1024 * 1024
_VMEM_LIMIT_BYTES = 40 * 1024 * 1024


def _pick_tiles(n, c, h, w, itemsize=4, budget=_VMEM_BLOCK_BUDGET_BYTES):
    """Pick (b_tile, h_tile) so a (b_tile, C, h_tile, W) f32 block fits budget.

    Normal case: h_tile = H, b_tile as large as the budget allows but capped
    so the batch-tile grid has at least 2 steps (keeps both v7x TensorCores
    fed).  Oversized-image fallback: tile H (multiple of 8) with b_tile = 1.
    No divisibility requirements; grids use cdiv and tails are handled
    in-kernel / by Pallas OOB-writeback masking.
    """
    per_batch = c * h * w * itemsize
    if per_batch <= budget:
        max_tile = max(1, budget // per_batch)
        b_tile = min(max_tile, pl.cdiv(n, 2)) if n >= 2 else 1
        return max(b_tile, 1), h
    # Single batch element exceeds the budget: tile H instead.
    per_8rows = c * w * itemsize * 8
    n_row_blocks = max(1, budget // per_8rows)
    h_tile = min(h, n_row_blocks * 8)
    return 1, max(h_tile, 8)


def _make_cutout_kernel(n_total):
    def kernel(start_ref, size_ref, o_ref):
        # start_ref / size_ref: full int32 arrays in SMEM (scalar prefetch).
        # o_ref: (b_tile, C, h_tile, W) output block in VMEM.
        b_tile, num_ch, h_tile, w = o_ref.shape
        base = pl.program_id(0) * b_tile
        h_off = pl.program_id(1) * h_tile
        # 2-D iotas hoisted out of the batch loop; reused for every element.
        h_idx = h_off + jax.lax.broadcasted_iota(jnp.int32, (h_tile, w), 0)
        w_idx = jax.lax.broadcasted_iota(jnp.int32, (h_tile, w), 1)

        def body(t, carry):
            # Clamp the SMEM index for the (possibly padded) tail batch block:
            # Pallas drops out-of-bounds output writebacks, but SMEM reads are
            # unchecked, so keep the index in range.
            idx = jnp.minimum(base + t, n_total - 1)
            s = start_ref[idx]
            e = s + size_ref[idx]
            inside = (h_idx >= s) & (h_idx < e) & (w_idx >= s) & (w_idx < e)
            mask2d = jnp.where(inside, jnp.float32(EPS), jnp.float32(1.0 - EPS))
            # Replicate across channels at the store (channel count is tiny,
            # keep it unrolled); fori_loop over t keeps exactly one mask2d
            # (16 vregs at 128x128) live at a time.
            for ch in range(num_ch):
                o_ref[t, ch, :, :] = mask2d
            return carry

        jax.lax.fori_loop(0, b_tile, body, 0)

    return kernel


def cutout_mask(x_shape, start_idxs, cut_sizes):
    """Builds the CutOut mask for an NCHW input with per-batch start indices."""
    N, C, H, W = x_shape
    b_tile, h_tile = _pick_tiles(N, C, H, W)
    grid = (pl.cdiv(N, b_tile), pl.cdiv(H, h_tile))
    grid_spec = pltpu.PrefetchScalarGridSpec(
        num_scalar_prefetch=2,  # start_idxs, cut_sizes land in SMEM
        grid=grid,
        in_specs=[],
        out_specs=pl.BlockSpec(
            (b_tile, C, h_tile, W), lambda b, h, s, c: (b, 0, h, 0)),
    )
    return pl.pallas_call(
        _make_cutout_kernel(N),
        out_shape=jax.ShapeDtypeStruct((N, C, H, W), jnp.float32),
        grid_spec=grid_spec,
        compiler_params=pltpu.CompilerParams(
            dimension_semantics=("parallel", "parallel"),
            vmem_limit_bytes=_VMEM_LIMIT_BYTES),
        cost_estimate=pl.CostEstimate(
            flops=0, transcendentals=0, bytes_accessed=N * C * H * W * 4),
    )(start_idxs.astype(jnp.int32), cut_sizes.astype(jnp.int32))


def cutout_forward(x, key):
    """Mirrors CutOut.forward: sample start indices, build the mask.

    The module's Beta(alpha, alpha) draw never affects the mask values
    (it only shapes the constant cutSizes tensor), so it is dropped here.
    """
    N = x.shape[0]
    H = x.shape[2]
    cut_sizes = jnp.full((N,), CUT_SIZE, dtype=jnp.int32)
    start_vals = jax.random.uniform(key, (N,), dtype=jnp.float32)
    start_idxs = (start_vals * (H - cut_sizes)).astype(jnp.int32)
    mask = cutout_mask(x.shape, start_idxs, cut_sizes)
    return mask, start_idxs, cut_sizes


if __name__ == "__main__":
    key = jax.random.PRNGKey(0)
    k_x, k_fwd = jax.random.split(key)
    # Spatial dims must be >= 112 for the module's fixed 112-pixel window.
    N, C, H, W = 4, 3, 128, 128
    x = jax.random.normal(k_x, (N, C, H, W), dtype=jnp.float32)

    mask, start_idxs, cut_sizes = cutout_forward(x, k_fwd)
    mask = jax.block_until_ready(mask)

    # Reference check in plain numpy (same semantics as the PyTorch loop).
    ref = np.full((N, C, H, W), 1.0 - EPS, dtype=np.float32)
    s_np = np.asarray(start_idxs)
    c_np = np.asarray(cut_sizes)
    for i in range(N):
        s = int(s_np[i])
        e = s + int(c_np[i])
        ref[i, :, s:e, s:e] = EPS
    np.testing.assert_allclose(np.asarray(mask), ref, rtol=0, atol=0)

    print("KERNEL_OK")
</pallas_src>

<mosaic_0001>
module attributes {stable_mosaic.version = 11 : i64} {
  func.func @kernel(%arg0: i32, %arg1: i32, %arg2: memref<4xi32, #tpu.memory_space<smem>>, %arg3: memref<4xi32, #tpu.memory_space<smem>>, %arg4: memref<2x3x128x128xf32, #tpu.memory_space<vmem>>) attributes {dimension_semantics = [#tpu.dimension_semantics<parallel>, #tpu.dimension_semantics<parallel>], iteration_bounds = array<i64: 2, 1>, scalar_prefetch = 2 : i64, scratch_operands = 0 : i64, tpu.core_type = #tpu.core_type<tc>, window_params = [{transform_indices = @transform_0, window_bounds = array<i64: 2, 3, 128, 128>}]} {
    %c2_i32 = arith.constant 2 : i32
    %0 = arith.muli %arg0, %c2_i32 : i32
    %c128_i32 = arith.constant 128 : i32
    %1 = arith.muli %arg1, %c128_i32 : i32
    %2 = tpu.iota {dimensions = array<i32: 0>} : vector<128x128xi32>
    %3 = vector.broadcast %1 : i32 to vector<128x128xi32>
    %4 = arith.addi %3, %2 : vector<128x128xi32>
    %5 = tpu.iota {dimensions = array<i32: 1>} : vector<128x128xi32>
    %c0_i32 = arith.constant 0 : i32
    %c2_i32_0 = arith.constant 2 : i32
    %6 = arith.addi %c0_i32, %c2_i32_0 : i32
    %c1_i32 = arith.constant 1 : i32
    scf.for %arg5 = %c0_i32 to %6 step %c1_i32  : i32 {
      %7 = arith.addi %0, %arg5 : i32
      %c3_i32 = arith.constant 3 : i32
      %8 = arith.minsi %7, %c3_i32 : i32
      %9 = arith.index_cast %8 : i32 to index
      %10 = memref.load %arg2[%9] : memref<4xi32, #tpu.memory_space<smem>>
      %11 = arith.index_cast %8 : i32 to index
      %12 = memref.load %arg3[%11] : memref<4xi32, #tpu.memory_space<smem>>
      %13 = arith.addi %10, %12 : i32
      %14 = vector.broadcast %10 : i32 to vector<128x128xi32>
      %15 = arith.cmpi sge, %4, %14 : vector<128x128xi32>
      %16 = vector.broadcast %13 : i32 to vector<128x128xi32>
      %17 = arith.cmpi slt, %4, %16 : vector<128x128xi32>
      %18 = arith.andi %15, %17 : vector<128x128xi1>
      %19 = vector.broadcast %10 : i32 to vector<128x128xi32>
      %20 = arith.cmpi sge, %5, %19 : vector<128x128xi32>
      %21 = arith.andi %18, %20 : vector<128x128xi1>
      %22 = vector.broadcast %13 : i32 to vector<128x128xi32>
      %23 = arith.cmpi slt, %5, %22 : vector<128x128xi32>
      %24 = arith.andi %21, %23 : vector<128x128xi1>
      %cst = arith.constant 1.000000e-03 : f32
      %cst_2 = arith.constant 9.990000e-01 : f32
      %25 = vector.broadcast %cst : f32 to vector<128x128xf32>
      %26 = vector.broadcast %cst_2 : f32 to vector<128x128xf32>
      %27 = arith.select %24, %25, %26 : vector<128x128xi1>, vector<128x128xf32>
      %28 = arith.index_cast %arg5 : i32 to index
      %c0 = arith.constant 0 : index
      %c0_3 = arith.constant 0 : index
      %c0_4 = arith.constant 0 : index
      %29 = vector.load %arg4[%28, %c0, %c0_3, %c0_4] : memref<2x3x128x128xf32, #tpu.memory_space<vmem>>, vector<1x1x128x128xf32>
      %30 = vector.shape_cast %29 : vector<1x1x128x128xf32> to vector<128x128xf32>
      %31 = vector.shape_cast %27 : vector<128x128xf32> to vector<1x1x128x128xf32>
      tpu.vector_store %arg4[%28, %c0, %c0_3, %c0_4], %31 {strides = array<i32>} : memref<2x3x128x128xf32, #tpu.memory_space<vmem>>, vector<1x1x128x128xf32>,
      %32 = arith.index_cast %arg5 : i32 to index
      %c1 = arith.constant 1 : index
      %c0_5 = arith.constant 0 : index
      %c0_6 = arith.constant 0 : index
      %33 = vector.load %arg4[%32, %c1, %c0_5, %c0_6] : memref<2x3x128x128xf32, #tpu.memory_space<vmem>>, vector<1x1x128x128xf32>
      %34 = vector.shape_cast %33 : vector<1x1x128x128xf32> to vector<128x128xf32>
      %35 = vector.shape_cast %27 : vector<128x128xf32> to vector<1x1x128x128xf32>
      tpu.vector_store %arg4[%32, %c1, %c0_5, %c0_6], %35 {strides = array<i32>} : memref<2x3x128x128xf32, #tpu.memory_space<vmem>>, vector<1x1x128x128xf32>,
      %36 = arith.index_cast %arg5 : i32 to index
      %c2 = arith.constant 2 : index
      %c0_7 = arith.constant 0 : index
      %c0_8 = arith.constant 0 : index
      %37 = vector.load %arg4[%36, %c2, %c0_7, %c0_8] : memref<2x3x128x128xf32, #tpu.memory_space<vmem>>, vector<1x1x128x128xf32>
      %38 = vector.shape_cast %37 : vector<1x1x128x128xf32> to vector<128x128xf32>
      %39 = vector.shape_cast %27 : vector<128x128xf32> to vector<1x1x128x128xf32>
      tpu.vector_store %arg4[%36, %c2, %c0_7, %c0_8], %39 {strides = array<i32>} : memref<2x3x128x128xf32, #tpu.memory_space<vmem>>, vector<1x1x128x128xf32>,
    }
    %c2_i32_1 = arith.constant 2 : i32
    return
  }
  func.func @transform_0(%arg0: i32, %arg1: i32, %arg2: memref<4xi32, #tpu.memory_space<smem>>, %arg3: memref<4xi32, #tpu.memory_space<smem>>) -> (i32, i32, i32, i32) {
    %c0_i32 = arith.constant 0 : i32
    %c0_i32_0 = arith.constant 0 : i32
    %c0_i32_1 = arith.constant 0 : i32
    return %arg0, %c0_i32, %arg1, %c0_i32_0 : i32, i32, i32, i32
  }
}

</mosaic_0001>

<llo_original>
// kernel: tpu_custom_call.1
$region0: #{tpu_custom_call.1}
  #allocation0 [shape = 'u32[]', space=smem, size = 0x4, offset = 0x4, fixed_abs, tag = 'smem constant byte address 0x4 - core index']
  #allocation1 [shape = 'u32[72,128]{1,0:T(1,128)}', space=vmem, size = 0x9000, scoped, tag = 'internal scratch']
  #allocation2 [shape = 's32[1]{0}', space=sflag, size = 0x4, scoped, tag = 'scoped memory for tpu_custom_call.1']
  #allocation3 [shape = 'u8[512]{0}', space=smem, size = 0x200, scoped, tag = 'prefetched SMEM operand 0']
  #allocation4 [shape = 'u8[512]{0}', space=smem, size = 0x200, scoped, tag = 'prefetched SMEM operand 1']
  %s0 = inlined_call_operand.hbm [shape: s32[4], index: 0, kind: input, shape index: {}]
  %s1 = inlined_call_operand.hbm [shape: s32[4], index: 1, kind: input, shape index: {}]
  %s2 = inlined_call_operand.hbm [shape: f32[4,3,128,128], index: 2, kind: output, shape index: {}]
  %s3 = sld [smem:[#allocation0]]
  $region32: #{tpu_custom_call.1} parent=0
    _
  %s5 = ssub.s32 1, %s3
  %s6 = scalar_select 0, %s5, %s3
  %s8 = sshll.u32 %s0, 4
  %s9 = int_to_ptr.hbm [resolvable:$true] %s8
  %11 = dma.hbm_to_smem %s9, 16, [#allocation3], [#allocation2]
  %s13 = sshll.u32 %s1, 4
  %s14 = int_to_ptr.hbm [resolvable:$true] %s13
  %16 = dma.hbm_to_smem %s14, 16, [#allocation4], [#allocation2]
  %18 = dma.done [#allocation2], 32
  %19 = sfence
  $region1: #{tpu_custom_call.1} parent=0
    #allocation5 [shape = 'u8[786432]{0}', space=vmem, size = 0xc0000, scoped, tag = 'output window, operand 0']
    #allocation6 [shape = 's32[2]{0}', space=sflag, size = 0x8, scoped, tag = 'scoped memory for tpu_custom_call.1']
    %20 = vsyncpa [#allocation6], 0
    %s21 = scalar_lea.sflag [#allocation6], 1
    %22 = vsyncpa %s21, 0
    loop: start=0, step=1, limit=3
    $region2: #{tpu_custom_call.1} parent=1 // loop_pre_header
      _
    $region3: #{tpu_custom_call.1} parent=1 // loop_header
      %s24 = sphi 0, %s28
      %p25 = scmp.ge.s32.totalorder %s24, 3
      %s30 = sphi 0, %s40
      %s31 = sphi 0, %s36
      %s32 = sphi 0, %s30
      %s33 = sphi 0, %s31
      %s45 = sphi 0, %s47
      %s48 = sphi 0, %s45
      %s58 = sphi 0, %s48
    $region4: #{tpu_custom_call.1} parent=1 // loop_header_branch
      %27 = sbr.rel (%p25) target = $region8
    $region5: #{tpu_custom_call.1} parent=1 // loop_body
      %s29 = ssub.s32 %s24, 1
      %s34 = sadd.s32 1, %s31
      %p35 = scmp.ge.s32.totalorder %s34, 1
      %s36 = scalar_select %p35, 0, %s34
      %s37 = sadd.s32 1, %s30
      %s38 = scalar_select %p35, %s37, %s30
      %p39 = scmp.ge.s32.totalorder %s38, 2
      %s40 = scalar_select %p39, 0, %s38
      %s41 = ssub.s32 %s30, %s40
      %s42 = ssub.s32 %s31, %s36
      %s43 = sor.u32 %s41, %s42
      %p44 = scmp.eq.s32.totalorder %s43, 0
      %s46 = sadd.s32 %s45, 1
      %s47 = scalar_select %p44, %s45, %s46
      %p49 = pneg %p44
      %p50 = scmp.eq.s32.totalorder %s24, 1
      %p51 = por %p49, %p50
      %p52 = scmp.ne.s32.totalorder %s45, %s48
      %p53 = scmp.eq.s32.totalorder %s24, 0
      %p54 = por %p52, %p53
      %p55 = scmp.ne.s32.totalorder %s45, %s48
      %p56 = scmp.eq.s32.totalorder %s29, 1
      %p57 = por %p55, %p56
      %p59 = scmp.ne.s32.totalorder %s48, %s58
      %p60 = scmp.eq.s32.totalorder %s29, 0
      %p61 = por %p59, %p60
      %p62 = scmp.lt.s32.totalorder %s24, 2
      // Predicated region
      $region9: #{tpu_custom_call.1} parent=5 // pred_check
        %p63 = pneg %p62
      $region10: #{tpu_custom_call.1} parent=5 // pred_check_branch
        %65 = sbr.rel (%p63) target = $region12
      $region11: #{tpu_custom_call.1} parent=5 // pred_region
        %p66 = pneg %p54
        %p67 = pneg %p51
        %s68 = sand.u32 %s45, 1
        %s69 = scalar_lea.sflag [#allocation6], %s68
        %s70 = sand.u32 %s45, 1
        %s71 = smul.addr %s70, 768
        %s72 = scalar_lea.vmem [#allocation5], %s71
        %s73 = smul.u32 2, %s30
        %s74 = smul.u32 16, %s31
        %s75 = smul.u32 %s30, 2
        %s76 = smul.u32 %s31, 128
        %v77 = vlaneseq
        %v78 = vshrl.u32 %v77, 7
        %v79 = vadd.s32 %v78, 8
        %v80 = vadd.s32 %v78, 16
        %v81 = vadd.s32 %v78, 24
        %v82 = vadd.s32 %v78, 32
        %v83 = vadd.s32 %v78, 40
        %v84 = vadd.s32 %v78, 48
        %v85 = vadd.s32 %v78, 56
        %v86 = vadd.s32 %v78, 64
        %v87 = vadd.s32 %v78, 72
        %v88 = vadd.s32 %v78, 80
        %v89 = vadd.s32 %v78, 88
        %v90 = vadd.s32 %v78, 96
        %v91 = vadd.s32 %v78, 104
        %v92 = vadd.s32 %v78, 112
        %v93 = vadd.s32 %v78, 120
        %v94 = vstv %s76
        %v95 = vadd.s32 %v94, %v78
        %v96 = vadd.s32 %v94, %v79
        %v97 = vadd.s32 %v94, %v80
        %v98 = vadd.s32 %v94, %v81
        %v99 = vadd.s32 %v94, %v82
        %v100 = vadd.s32 %v94, %v83
        %v101 = vadd.s32 %v94, %v84
        %v102 = vadd.s32 %v94, %v85
        %v103 = vadd.s32 %v94, %v86
        %v104 = vadd.s32 %v94, %v87
        %v105 = vadd.s32 %v94, %v88
        %v106 = vadd.s32 %v94, %v89
        %v107 = vadd.s32 %v94, %v90
        %v108 = vadd.s32 %v94, %v91
        %v109 = vadd.s32 %v94, %v92
        %v110 = vadd.s32 %v94, %v93
        %v111 = vlaneseq
        %v112 = vand.u32 %v111, 127
        loop: start=0, step=1, limit=2
        $region13: #{tpu_custom_call.1} parent=11 // loop_pre_header
          _
        $region14: #{tpu_custom_call.1} parent=11 // loop_header
          %s114 = sphi 0, %s118
          %p115 = scmp.ge.s32.totalorder %s114, 2
        $region15: #{tpu_custom_call.1} parent=11 // loop_header_branch
          %117 = sbr.rel (%p115) target = $region19
        $region16: #{tpu_custom_call.1} parent=11 // loop_body
          %s119 = sadd.s32 %s75, %s114
          %p120 = scmp.lt.s32.totalorder %s119, 3
          %s121 = scalar_select %p120, %s119, 3
          %s122 = sld [smem:[#allocation3 + %s121]]
          %s123 = sld [smem:[#allocation4 + %s121]]
          %s124 = sadd.s32 %s122, %s123
          %v125 = vstv %s122
          %vm126 = vcmp.ge.s32.totalorder %v95, %v125
          %vm127 = vcmp.ge.s32.totalorder %v96, %v125
          %vm128 = vcmp.ge.s32.totalorder %v97, %v125
          %vm129 = vcmp.ge.s32.totalorder %v98, %v125
          %vm130 = vcmp.ge.s32.totalorder %v99, %v125
          %vm131 = vcmp.ge.s32.totalorder %v100, %v125
          %vm132 = vcmp.ge.s32.totalorder %v101, %v125
          %vm133 = vcmp.ge.s32.totalorder %v102, %v125
          %vm134 = vcmp.ge.s32.totalorder %v103, %v125
          %vm135 = vcmp.ge.s32.totalorder %v104, %v125
          %vm136 = vcmp.ge.s32.totalorder %v105, %v125
          %vm137 = vcmp.ge.s32.totalorder %v106, %v125
          %vm138 = vcmp.ge.s32.totalorder %v107, %v125
          %vm139 = vcmp.ge.s32.totalorder %v108, %v125
          %vm140 = vcmp.ge.s32.totalorder %v109, %v125
          %vm141 = vcmp.ge.s32.totalorder %v110, %v125
          %v142 = vstv %s124
          %vm143 = vcmp.lt.s32.totalorder %v95, %v142
          %vm144 = vcmp.lt.s32.totalorder %v96, %v142
          %vm145 = vcmp.lt.s32.totalorder %v97, %v142
          %vm146 = vcmp.lt.s32.totalorder %v98, %v142
          %vm147 = vcmp.lt.s32.totalorder %v99, %v142
          %vm148 = vcmp.lt.s32.totalorder %v100, %v142
          %vm149 = vcmp.lt.s32.totalorder %v101, %v142
          %vm150 = vcmp.lt.s32.totalorder %v102, %v142
          %vm151 = vcmp.lt.s32.totalorder %v103, %v142
          %vm152 = vcmp.lt.s32.totalorder %v104, %v142
          %vm153 = vcmp.lt.s32.totalorder %v105, %v142
          %vm154 = vcmp.lt.s32.totalorder %v106, %v142
          %vm155 = vcmp.lt.s32.totalorder %v107, %v142
          %vm156 = vcmp.lt.s32.totalorder %v108, %v142
          %vm157 = vcmp.lt.s32.totalorder %v109, %v142
          %vm158 = vcmp.lt.s32.totalorder %v110, %v142
          %vm159 = vmand %vm126, %vm143
          %vm160 = vmand %vm127, %vm144
          %vm161 = vmand %vm128, %vm145
          %vm162 = vmand %vm129, %vm146
          %vm163 = vmand %vm130, %vm147
          %vm164 = vmand %vm131, %vm148
          %vm165 = vmand %vm132, %vm149
          %vm166 = vmand %vm133, %vm150
          %vm167 = vmand %vm134, %vm151
          %vm168 = vmand %vm135, %vm152
          %vm169 = vmand %vm136, %vm153
          %vm170 = vmand %vm137, %vm154
          %vm171 = vmand %vm138, %vm155
          %vm172 = vmand %vm139, %vm156
          %vm173 = vmand %vm140, %vm157
          %vm174 = vmand %vm141, %vm158
          %vm175 = vcmp.ge.s32.totalorder %v112, %v125
          %vm176 = vmand %vm159, %vm175
          %vm177 = vmand %vm160, %vm175
          %vm178 = vmand %vm161, %vm175
          %vm179 = vmand %vm162, %vm175
          %vm180 = vmand %vm163, %vm175
          %vm181 = vmand %vm164, %vm175
          %vm182 = vmand %vm165, %vm175
          %vm183 = vmand %vm166, %vm175
          %vm184 = vmand %vm167, %vm175
          %vm185 = vmand %vm168, %vm175
          %vm186 = vmand %vm169, %vm175
          %vm187 = vmand %vm170, %vm175
          %vm188 = vmand %vm171, %vm175
          %vm189 = vmand %vm172, %vm175
          %vm190 = vmand %vm173, %vm175
          %vm191 = vmand %vm174, %vm175
          %vm192 = vcmp.lt.s32.totalorder %v112, %v142
          %vm193 = vmand %vm176, %vm192
          %vm194 = vmand %vm177, %vm192
          %vm195 = vmand %vm178, %vm192
          %vm196 = vmand %vm179, %vm192
          %vm197 = vmand %vm180, %vm192
          %vm198 = vmand %vm181, %vm192
          %vm199 = vmand %vm182, %vm192
          %vm200 = vmand %vm183, %vm192
          %vm201 = vmand %vm184, %vm192
          %vm202 = vmand %vm185, %vm192
          %vm203 = vmand %vm186, %vm192
          %vm204 = vmand %vm187, %vm192
          %vm205 = vmand %vm188, %vm192
          %vm206 = vmand %vm189, %vm192
          %vm207 = vmand %vm190, %vm192
          %vm208 = vmand %vm191, %vm192
          %v209 = vsel %vm193, 0.001, 0.999
          %v210 = vsel %vm194, 0.001, 0.999
          %v211 = vsel %vm195, 0.001, 0.999
          %v212 = vsel %vm196, 0.001, 0.999
          %v213 = vsel %vm197, 0.001, 0.999
          %v214 = vsel %vm198, 0.001, 0.999
          %v215 = vsel %vm199, 0.001, 0.999
          %v216 = vsel %vm200, 0.001, 0.999
          %v217 = vsel %vm201, 0.001, 0.999
          %v218 = vsel %vm202, 0.001, 0.999
          %v219 = vsel %vm203, 0.001, 0.999
          %v220 = vsel %vm204, 0.001, 0.999
          %v221 = vsel %vm205, 0.001, 0.999
          %v222 = vsel %vm206, 0.001, 0.999
          %v223 = vsel %vm207, 0.001, 0.999
          %v224 = vsel %vm208, 0.001, 0.999
          %s225 = smul.u32 %s114, 384
          %s226 = scalar_lea.vmem %s72, %s225 [#allocation5]
          %227 = vst [vmem:[%s226] sm:$0xff] %v209
          %228 = vst [vmem:[%s226 + $0x8] sm:$0xff] %v210
          %229 = vst [vmem:[%s226 + $0x10] sm:$0xff] %v211
          %230 = vst [vmem:[%s226 + $0x18] sm:$0xff] %v212
          %231 = vst [vmem:[%s226 + $0x20] sm:$0xff] %v213
          %232 = vst [vmem:[%s226 + $0x28] sm:$0xff] %v214
          %233 = vst [vmem:[%s226 + $0x30] sm:$0xff] %v215
          %234 = vst [vmem:[%s226 + $0x38] sm:$0xff] %v216
          %235 = vst [vmem:[%s226 + $0x40] sm:$0xff] %v217
          %236 = vst [vmem:[%s226 + $0x48] sm:$0xff] %v218
          %237 = vst [vmem:[%s226 + $0x50] sm:$0xff] %v219
          %238 = vst [vmem:[%s226 + $0x58] sm:$0xff] %v220
          %239 = vst [vmem:[%s226 + $0x60] sm:$0xff] %v221
          %240 = vst [vmem:[%s226 + $0x68] sm:$0xff] %v222
          %241 = vst [vmem:[%s226 + $0x70] sm:$0xff] %v223
          %242 = vst [vmem:[%s226 + $0x78] sm:$0xff] %v224
          %s243 = sadd.s32 128, %s225
          %s244 = scalar_lea.vmem %s72, %s243 [#allocation5]
          %245 = vst [vmem:[%s244] sm:$0xff] %v209
          %246 = vst [vmem:[%s244 + $0x8] sm:$0xff] %v210
          %247 = vst [vmem:[%s244 + $0x10] sm:$0xff] %v211
          %248 = vst [vmem:[%s244 + $0x18] sm:$0xff] %v212
          %249 = vst [vmem:[%s244 + $0x20] sm:$0xff] %v213
          %250 = vst [vmem:[%s244 + $0x28] sm:$0xff] %v214
          %251 = vst [vmem:[%s244 + $0x30] sm:$0xff] %v215
          %252 = vst [vmem:[%s244 + $0x38] sm:$0xff] %v216
          %253 = vst [vmem:[%s244 + $0x40] sm:$0xff] %v217
          %254 = vst [vmem:[%s244 + $0x48] sm:$0xff] %v218
          %255 = vst [vmem:[%s244 + $0x50] sm:$0xff] %v219
          %256 = vst [vmem:[%s244 + $0x58] sm:$0xff] %v220
          %257 = vst [vmem:[%s244 + $0x60] sm:$0xff] %v221
          %258 = vst [vmem:[%s244 + $0x68] sm:$0xff] %v222
          %259 = vst [vmem:[%s244 + $0x70] sm:$0xff] %v223
          %260 = vst [vmem:[%s244 + $0x78] sm:$0xff] %v224
          %s261 = sadd.s32 256, %s225
          %s262 = scalar_lea.vmem %s72, %s261 [#allocation5]
          %263 = vst [vmem:[%s262] sm:$0xff] %v209
          %264 = vst [vmem:[%s262 + $0x8] sm:$0xff] %v210
          %265 = vst [vmem:[%s262 + $0x10] sm:$0xff] %v211
          %266 = vst [vmem:[%s262 + $0x18] sm:$0xff] %v212
          %267 = vst [vmem:[%s262 + $0x20] sm:$0xff] %v213
          %268 = vst [vmem:[%s262 + $0x28] sm:$0xff] %v214
          %269 = vst [vmem:[%s262 + $0x30] sm:$0xff] %v215
          %270 = vst [vmem:[%s262 + $0x38] sm:$0xff] %v216
          %271 = vst [vmem:[%s262 + $0x40] sm:$0xff] %v217
          %272 = vst [vmem:[%s262 + $0x48] sm:$0xff] %v218
          %273 = vst [vmem:[%s262 + $0x50] sm:$0xff] %v219
          %274 = vst [vmem:[%s262 + $0x58] sm:$0xff] %v220
          %275 = vst [vmem:[%s262 + $0x60] sm:$0xff] %v221
          %276 = vst [vmem:[%s262 + $0x68] sm:$0xff] %v222
          %277 = vst [vmem:[%s262 + $0x70] sm:$0xff] %v223
          %278 = vst [vmem:[%s262 + $0x78] sm:$0xff] %v224
        $region17: #{tpu_custom_call.1} parent=11 // loop_footer
          %s118 = sadd.s32 1, %s114
        $region18: #{tpu_custom_call.1} parent=11 // loop_footer_branch
          %113 = sbr.rel target = $region14
        $region19: #{tpu_custom_call.1} parent=11 // loop_exit
          _
        %s279 = sand.u32 %s45, 1
        %s280 = scalar_lea.sflag [#allocation6], %s279
        %s281 = sand.u32 %s45, 1
        %s282 = smul.addr %s281, 768
        %s283 = scalar_lea.vmem [#allocation5], %s282
        // Predicated region
        $region20: #{tpu_custom_call.1} parent=11 // pred_check
          %p284 = pneg %p51
        $region21: #{tpu_custom_call.1} parent=11 // pred_check_branch
          %286 = sbr.rel (%p284) target = $region23
        $region22: #{tpu_custom_call.1} parent=11 // pred_region
          %s287 = smul.u32 2, %s30
          %s288 = smul.u32 16, %s31
          %290 = vsyncadd %s280, 0
          %s291 = smul.addr %s287, 48
          %s292 = sadd.s32 %s288, %s291
          %s293 = smul.addr %s292, 8
          %s294 = scalar_lea.hbm %s2, %s293
          %s295 = sshll.u32 %s283, 4
          %s296 = int_to_ptr.vmem [resolvable:$true] %s295
          %s297 = sshll.u32 %s294, 4
          %s298 = int_to_ptr.hbm [resolvable:$true] %s297
          %303 = dma.vmem_to_hbm [thread:$0]  %s296, 12288, %s298, %s280, 128, 128, 8
        $region23: #{tpu_custom_call.1} parent=11 // pred_fallthru
          _
      $region12: #{tpu_custom_call.1} parent=5 // pred_fallthru
        _
      %p304 = scmp.le.s32.totalorder 1, %s24
      // Predicated region
      $region24: #{tpu_custom_call.1} parent=5 // pred_check
        %p305 = pneg %p304
      $region25: #{tpu_custom_call.1} parent=5 // pred_check_branch
        %307 = sbr.rel (%p305) target = $region27
      $region26: #{tpu_custom_call.1} parent=5 // pred_region
        %s308 = ssub.s32 %s24, 1
        // Predicated region
        $region28: #{tpu_custom_call.1} parent=26 // pred_check
          %p309 = pneg %p57
        $region29: #{tpu_custom_call.1} parent=26 // pred_check_branch
          %311 = sbr.rel (%p309) target = $region31
        $region30: #{tpu_custom_call.1} parent=26 // pred_region
          %s312 = sand.u32 %s48, 1
          %s313 = scalar_lea.sflag [#allocation6], %s312
          %s314 = sand.u32 %s48, 1
          %s315 = smul.addr %s314, 768
          %s316 = scalar_lea.vmem [#allocation5], %s315
          %318 = dma.done %s313, 12288
        $region31: #{tpu_custom_call.1} parent=26 // pred_fallthru
          _
      $region27: #{tpu_custom_call.1} parent=5 // pred_fallthru
        _
    $region6: #{tpu_custom_call.1} parent=1 // loop_footer
      %s28 = sadd.s32 1, %s24
    $region7: #{tpu_custom_call.1} parent=1 // loop_footer_branch
      %23 = sbr.rel target = $region3
    $region8: #{tpu_custom_call.1} parent=1 // loop_exit
      _
    %319 = vsyncpa [#allocation6], 1
    %s320 = scalar_lea.sflag [#allocation6], 1
    %321 = vsyncpa %s320, 1

</llo_original>
